<compile_context>
chip_gen: v7x
topology: tpu7x:2x2x1
jax: 0.10.0
libtpu: 0.0.40
codegen_flags: <defaults>
</compile_context>

<pallas_src>
import jax
import jax.numpy as jnp
from jax.experimental import pallas as pl
from jax.experimental.pallas import tpu as pltpu


def _round_up(x, m):
    return ((x + m - 1) // m) * m


def _linear_relu_kernel(x_ref, w_ref, b_ref, o_ref, acc_ref):
    """Produces one (TM, TN) output tile; K is the last (reduction) grid axis."""
    k = pl.program_id(2)

    @pl.when(k == 0)
    def _():
        acc_ref[...] = jnp.zeros_like(acc_ref)

    acc_ref[...] += jnp.dot(x_ref[...], w_ref[...],
                            preferred_element_type=jnp.float32)

    @pl.when(k == pl.num_programs(2) - 1)
    def _():
        y = acc_ref[...] + b_ref[...]            # bias broadcast over TM rows
        o_ref[...] = jnp.maximum(y, 0.0).astype(o_ref.dtype)


def prot_trans_forward_batched(x, w0_t, b0_row):
    """relu(x @ w0_t + b0) for a batch of protein feature rows.

    x:      (M, K) float array (cast to bf16 for the MXU)
    w0_t:   (K, N) bfloat16  -- Linear0 weight stored transposed
    b0_row: (1, N) float32
    """
    M, K = x.shape
    Kw, N = w0_t.shape
    assert Kw == K and b0_row.shape == (1, N)

    x = x.astype(jnp.bfloat16)                   # no-op if already bf16

    # Lane/sublane-aligned padded sizes and tile sizes.
    K_p = _round_up(K, 128)
    N_p = _round_up(N, 128)
    TK = 256 if K_p % 256 == 0 else 128
    TN = 256 if N_p % 256 == 0 else 128
    M_p8 = _round_up(M, 8)
    TM = min(M_p8, 256)
    M_p = _round_up(M_p8, TM)

    # Zero-pad only when needed (zeros contribute nothing to the dot).
    if (M_p, K_p) != (M, K):
        x = jnp.pad(x, ((0, M_p - M), (0, K_p - K)))
    if (K_p, N_p) != (K, N):
        w0_t = jnp.pad(w0_t, ((0, K_p - K), (0, N_p - N)))
    if N_p != N:
        b0_row = jnp.pad(b0_row, ((0, 0), (0, N_p - N)))

    grid = (M_p // TM, N_p // TN, K_p // TK)

    out = pl.pallas_call(
        _linear_relu_kernel,
        out_shape=jax.ShapeDtypeStruct((M_p, N_p), jnp.float32),
        grid_spec=pltpu.PrefetchScalarGridSpec(
            num_scalar_prefetch=0,
            grid=grid,
            in_specs=[
                pl.BlockSpec((TM, TK), lambda i, j, k: (i, k)),   # x tile
                pl.BlockSpec((TK, TN), lambda i, j, k: (k, j)),   # W0^T tile
                pl.BlockSpec((1, TN), lambda i, j, k: (0, j)),    # bias tile
            ],
            out_specs=pl.BlockSpec((TM, TN), lambda i, j, k: (i, j)),
            scratch_shapes=[pltpu.VMEM((TM, TN), jnp.float32)],
        ),
        compiler_params=pltpu.CompilerParams(
            dimension_semantics=("parallel", "parallel", "arbitrary"),
            vmem_limit_bytes=32 * 1024 * 1024,
        ),
    )(x, w0_t, b0_row)

    if (M_p, N_p) != (M, N):
        out = out[:M, :N]
    return out


def prot_trans_forward(prot_feat, w0_t, b0_row, use_pallas=True):
    """Exact module forward: view(1, -1) -> Linear0 -> ReLU -> (1, latent_dim)."""
    x = jnp.reshape(prot_feat, (1, -1))
    if not use_pallas:
        # Review note: a single (1,K) GEMV is launch-overhead bound; a fused
        # XLA expression has lower fixed cost than a pallas_call for M=1.
        return jnp.maximum(
            jnp.dot(x.astype(jnp.bfloat16), w0_t,
                    preferred_element_type=jnp.float32) + b0_row, 0.0)
    return prot_trans_forward_batched(x, w0_t, b0_row)


def init_params(key, prot_dim, latent_dim):
    """torch.nn.Linear-style init (uniform +/- 1/sqrt(fan_in)).

    Linear0 weight is returned already transposed to (prot_dim, latent_dim) and
    in bfloat16 (halves the weight DMA); bias pre-shaped to (1, latent_dim)
    float32 so the hot path does no per-call reshapes/casts.  The second Linear
    exists in the PyTorch __init__ but is never used by forward().
    """
    k0w, k0b, k1w, k1b = jax.random.split(key, 4)
    bound0 = 1.0 / jnp.sqrt(jnp.float32(prot_dim))
    w0_t = jax.random.uniform(k0w, (prot_dim, latent_dim), jnp.float32,
                              minval=-bound0, maxval=bound0).astype(jnp.bfloat16)
    b0_row = jax.random.uniform(k0b, (1, latent_dim), jnp.float32,
                                minval=-bound0, maxval=bound0)
    bound1 = 1.0 / jnp.sqrt(jnp.float32(latent_dim))
    # TODO(synk): trans_prot[2] (second Linear) is never executed by forward();
    # initialized for parity only.
    w1_t = jax.random.uniform(k1w, (latent_dim, latent_dim), jnp.float32,
                              minval=-bound1, maxval=bound1).astype(jnp.bfloat16)
    b1_row = jax.random.uniform(k1b, (1, latent_dim), jnp.float32,
                                minval=-bound1, maxval=bound1)
    return w0_t, b0_row, w1_t, b1_row


if __name__ == "__main__":
    # Module defaults are prot_dim=1280, latent_dim=256; shrunk for the test.
    PROT_DIM = 384     # multiple of 128; not of 256 -> exercises K tiling (3 steps)
    LATENT_DIM = 128
    BATCH = 16         # batched hot path per review (fill MXU rows / sublanes)

    key = jax.random.PRNGKey(0)
    kx, kp = jax.random.split(key)

    prot_feats = jax.random.normal(kx, (BATCH, PROT_DIM), jnp.float32)
    w0_t, b0_row, _w1_t, _b1_row = init_params(kp, PROT_DIM, LATENT_DIM)

    # Batched Pallas path (M proteins per call).
    out_batched = jax.block_until_ready(
        prot_trans_forward_batched(prot_feats, w0_t, b0_row))

    # Exact single-protein module semantics: view(1, -1) -> Linear0 -> ReLU.
    out_single = jax.block_until_ready(
        prot_trans_forward(prot_feats[0], w0_t, b0_row))

    # Plain-JAX reference with the same bf16 rounding applied to x and W.
    x_bf = prot_feats.astype(jnp.bfloat16).astype(jnp.float32)
    w_bf = w0_t.astype(jnp.float32)
    ref = jnp.maximum(x_bf @ w_bf + b0_row, 0.0)

    assert out_batched.shape == (BATCH, LATENT_DIM)
    assert out_single.shape == (1, LATENT_DIM)
    assert jnp.allclose(out_batched, ref, atol=2e-3, rtol=2e-3), (
        float(jnp.max(jnp.abs(out_batched - ref))))
    assert jnp.allclose(out_single, ref[:1], atol=2e-3, rtol=2e-3)

    print("KERNEL_OK")
</pallas_src>

<mosaic_0001>
module attributes {stable_mosaic.version = 11 : i64} {
  func.func @_linear_relu_kernel(%arg0: i32, %arg1: i32, %arg2: i32, %arg3: memref<16x128xbf16, #tpu.memory_space<vmem>>, %arg4: memref<128x128xbf16, #tpu.memory_space<vmem>>, %arg5: memref<1x128xf32, #tpu.memory_space<vmem>>, %arg6: memref<16x128xf32, #tpu.memory_space<vmem>>, %arg7: memref<16x128xf32, #tpu.memory_space<vmem>>) attributes {dimension_semantics = [#tpu.dimension_semantics<parallel>, #tpu.dimension_semantics<parallel>, #tpu.dimension_semantics<arbitrary>], iteration_bounds = array<i64: 1, 1, 3>, scalar_prefetch = 0 : i64, scratch_operands = 1 : i64, tpu.core_type = #tpu.core_type<tc>, window_params = [{transform_indices = @transform_0, window_bounds = array<i64: 16, 128>}, {transform_indices = @transform_1, window_bounds = array<i64: 128, 128>}, {transform_indices = @transform_2, window_bounds = array<i64: 1, 128>}, {transform_indices = @transform_3, window_bounds = array<i64: 16, 128>}]} {
    %c0_i32 = arith.constant 0 : i32
    %0 = arith.cmpi eq, %arg2, %c0_i32 : i32
    %1 = arith.extui %0 : i1 to i32
    %c0_i32_0 = arith.constant 0 : i32
    %2 = arith.cmpi ne, %1, %c0_i32_0 : i32
    scf.if %2 {
      %cst_9 = arith.constant 0.000000e+00 : f32
      %12 = vector.broadcast %cst_9 : f32 to vector<16x128xf32>
      %c0_10 = arith.constant 0 : index
      %c0_11 = arith.constant 0 : index
      %13 = vector.load %arg7[%c0_10, %c0_11] : memref<16x128xf32, #tpu.memory_space<vmem>>, vector<16x128xf32>
      tpu.vector_store %arg7[%c0_10, %c0_11], %12 {strides = array<i32>} : memref<16x128xf32, #tpu.memory_space<vmem>>, vector<16x128xf32>,
    } else {
    }
    %c0 = arith.constant 0 : index
    %c0_1 = arith.constant 0 : index
    %3 = vector.load %arg7[%c0, %c0_1] : memref<16x128xf32, #tpu.memory_space<vmem>>, vector<16x128xf32>
    %c0_2 = arith.constant 0 : index
    %c0_3 = arith.constant 0 : index
    %4 = vector.load %arg3[%c0_2, %c0_3] : memref<16x128xbf16, #tpu.memory_space<vmem>>, vector<16x128xbf16>
    %c0_4 = arith.constant 0 : index
    %c0_5 = arith.constant 0 : index
    %5 = vector.load %arg4[%c0_4, %c0_5] : memref<128x128xbf16, #tpu.memory_space<vmem>>, vector<128x128xbf16>
    %cst = arith.constant dense<0.000000e+00> : vector<16x128xf32>
    %6 = tpu.matmul %4, %5, %cst {dimension_numbers = #tpu.dot_dimension_numbers<[1], [0], [0], [1], [0, 0, 1, 1], [], []>} : vector<16x128xbf16>, vector<128x128xbf16>, vector<16x128xf32> -> vector<16x128xf32>
    %7 = arith.addf %3, %6 : vector<16x128xf32>
    %c0_6 = arith.constant 0 : index
    %c0_7 = arith.constant 0 : index
    %8 = vector.load %arg7[%c0_6, %c0_7] : memref<16x128xf32, #tpu.memory_space<vmem>>, vector<16x128xf32>
    tpu.vector_store %arg7[%c0_6, %c0_7], %7 {strides = array<i32>} : memref<16x128xf32, #tpu.memory_space<vmem>>, vector<16x128xf32>,
    %c2_i32 = arith.constant 2 : i32
    %9 = arith.cmpi eq, %arg2, %c2_i32 : i32
    %10 = arith.extui %9 : i1 to i32
    %c0_i32_8 = arith.constant 0 : i32
    %11 = arith.cmpi ne, %10, %c0_i32_8 : i32
    scf.if %11 {
      %c0_9 = arith.constant 0 : index
      %c0_10 = arith.constant 0 : index
      %12 = vector.load %arg7[%c0_9, %c0_10] : memref<16x128xf32, #tpu.memory_space<vmem>>, vector<16x128xf32>
      %c0_11 = arith.constant 0 : index
      %c0_12 = arith.constant 0 : index
      %13 = vector.load %arg5[%c0_11, %c0_12] : memref<1x128xf32, #tpu.memory_space<vmem>>, vector<1x128xf32>
      %14 = vector.broadcast %13 : vector<1x128xf32> to vector<16x128xf32>
      %15 = arith.addf %12, %14 : vector<16x128xf32>
      %cst_13 = arith.constant 0.000000e+00 : f32
      %16 = vector.broadcast %cst_13 : f32 to vector<16x128xf32>
      %17 = arith.maximumf %15, %16 : vector<16x128xf32>
      %c0_14 = arith.constant 0 : index
      %c0_15 = arith.constant 0 : index
      %18 = vector.load %arg6[%c0_14, %c0_15] : memref<16x128xf32, #tpu.memory_space<vmem>>, vector<16x128xf32>
      tpu.vector_store %arg6[%c0_14, %c0_15], %17 {strides = array<i32>} : memref<16x128xf32, #tpu.memory_space<vmem>>, vector<16x128xf32>,
    } else {
    }
    return
  }
  func.func @transform_0(%arg0: i32, %arg1: i32, %arg2: i32) -> (i32, i32) {
    %c0_i32 = arith.constant 0 : i32
    return %arg0, %arg2 : i32, i32
  }
  func.func @transform_1(%arg0: i32, %arg1: i32, %arg2: i32) -> (i32, i32) {
    %c0_i32 = arith.constant 0 : i32
    return %arg2, %arg1 : i32, i32
  }
  func.func @transform_2(%arg0: i32, %arg1: i32, %arg2: i32) -> (i32, i32) {
    %c0_i32 = arith.constant 0 : i32
    %c0_i32_0 = arith.constant 0 : i32
    return %c0_i32, %arg1 : i32, i32
  }
  func.func @transform_3(%arg0: i32, %arg1: i32, %arg2: i32) -> (i32, i32) {
    %c0_i32 = arith.constant 0 : i32
    return %arg0, %arg1 : i32, i32
  }
}

</mosaic_0001>

<llo_original>
// kernel: tpu_custom_call.1
$region0: #{tpu_custom_call.1}
  #allocation0 [shape = 'u32[]', space=smem, size = 0x4, offset = 0x4, fixed_abs, tag = 'smem constant byte address 0x4 - core index']
  #allocation1 [shape = 'u32[144,128]{1,0:T(1,128)}', space=vmem, size = 0x12000, scoped, tag = 'internal scratch']
  #allocation2 [shape = 'f32[16,128]{1,0:T(8,128)}', space=vmem, size = 0x2000, scoped, tag = 'scratch operand']
  %s0 = inlined_call_operand.hbm [shape: bf16[16,384], index: 0, kind: input, shape index: {}]
  %s1 = inlined_call_operand.hbm [shape: bf16[384,128], index: 1, kind: input, shape index: {}]
  %s2 = inlined_call_operand.vmem [shape: f32[1,128], index: 2, kind: input, shape index: {}]
  %s3 = inlined_call_operand.hbm [shape: f32[16,128], index: 3, kind: output, shape index: {}]
  %s4 = sld [smem:[#allocation0]]
  $region61: #{tpu_custom_call.1} parent=0
    _
  %s6 = ssub.s32 1, %s4
  %s7 = scalar_select 0, %s6, %s4
  $region1: #{tpu_custom_call.1} parent=0
    #allocation3 [shape = 'u8[8192]{0}', space=vmem, size = 0x2000, scoped, tag = 'input window, operand 0']
    #allocation4 [shape = 's32[2]{0}', space=sflag, size = 0x8, scoped, tag = 'scoped memory for tpu_custom_call.1']
    #allocation5 [shape = 's32[2]{0}', space=sflag, size = 0x8, scoped, tag = 'scoped memory for tpu_custom_call.1']
    #allocation6 [shape = 'u8[65536]{0}', space=vmem, size = 0x10000, scoped, tag = 'input window, operand 1']
    #allocation7 [shape = 's32[2]{0}', space=sflag, size = 0x8, scoped, tag = 'scoped memory for tpu_custom_call.1']
    #allocation8 [shape = 'u8[8192]{0}', space=vmem, size = 0x2000, scoped, tag = 'output window, operand 0, single buffered']
    %8 = vsyncpa [#allocation4], 0
    %s9 = scalar_lea.sflag [#allocation4], 1
    %10 = vsyncpa %s9, 0
    %11 = vsyncpa [#allocation7], 0
    %s12 = scalar_lea.sflag [#allocation7], 1
    %13 = vsyncpa %s12, 0
    %14 = vsyncpa [#allocation5], 0
    loop: start=0, step=1, limit=5
    $region2: #{tpu_custom_call.1} parent=1 // loop_pre_header
      _
    $region3: #{tpu_custom_call.1} parent=1 // loop_header
      %s16 = sphi 0, %s20
      %p17 = scmp.ge.s32.totalorder %s16, 5
      %s23 = sphi 0, %s42
      %s24 = sphi 0, %s38
      %s25 = sphi 0, %s34
      %s26 = sphi 0, %s23
      %s27 = sphi 0, %s24
      %s28 = sphi 0, %s25
      %s29 = sphi 0, %s26
      %s30 = sphi 0, %s27
      %s31 = sphi 0, %s28
      %s47 = sphi 0, %s49
      %s50 = sphi 0, %s47
      %s51 = sphi 0, %s50
      %s67 = sphi 0, %s51
      %s75 = sphi 0, %s77
      %s78 = sphi 0, %s75
      %s79 = sphi 0, %s78
      %s95 = sphi 0, %s79
      %s101 = sphi 0, %s103
      %s104 = sphi 0, %s101
      %s105 = sphi 0, %s104
      %s121 = sphi 0, %s105
      %s129 = sphi 0, %s131
      %s132 = sphi 0, %s129
      %s133 = sphi 0, %s132
      %s149 = sphi 0, %s133
    $region4: #{tpu_custom_call.1} parent=1 // loop_header_branch
      %19 = sbr.rel (%p17) target = $region8
    $region5: #{tpu_custom_call.1} parent=1 // loop_body
      %s21 = ssub.s32 %s16, 1
      %s22 = ssub.s32 %s16, 2
      %s32 = sadd.s32 1, %s25
      %p33 = scmp.ge.s32.totalorder %s32, 3
      %s34 = scalar_select %p33, 0, %s32
      %s35 = sadd.s32 1, %s24
      %s36 = scalar_select %p33, %s35, %s24
      %p37 = scmp.ge.s32.totalorder %s36, 1
      %s38 = scalar_select %p37, 0, %s36
      %s39 = sadd.s32 1, %s23
      %s40 = scalar_select %p37, %s39, %s23
      %p41 = scmp.ge.s32.totalorder %s40, 1
      %s42 = scalar_select %p41, 0, %s40
      %s43 = ssub.s32 %s23, %s42
      %s44 = ssub.s32 %s25, %s34
      %s45 = sor.u32 %s43, %s44
      %p46 = scmp.eq.s32.totalorder %s45, 0
      %s48 = sadd.s32 %s47, 1
      %s49 = scalar_select %p46, %s47, %s48
      %p52 = pneg %p46
      %p53 = scmp.eq.s32.totalorder %s16, 2
      %p54 = por %p52, %p53
      %p55 = scmp.ne.s32.totalorder %s47, %s50
      %p56 = scmp.eq.s32.totalorder %s16, 0
      %p57 = por %p55, %p56
      %p58 = scmp.ne.s32.totalorder %s47, %s50
      %p59 = scmp.eq.s32.totalorder %s21, 2
      %p60 = por %p58, %p59
      %p61 = scmp.ne.s32.totalorder %s50, %s51
      %p62 = scmp.eq.s32.totalorder %s21, 0
      %p63 = por %p61, %p62
      %p64 = scmp.ne.s32.totalorder %s50, %s51
      %p65 = scmp.eq.s32.totalorder %s22, 2
      %p66 = por %p64, %p65
      %p68 = scmp.ne.s32.totalorder %s51, %s67
      %p69 = scmp.eq.s32.totalorder %s22, 0
      %p70 = por %p68, %p69
      %s71 = ssub.s32 %s25, %s34
      %s72 = ssub.s32 %s24, %s38
      %s73 = sor.u32 %s71, %s72
      %p74 = scmp.eq.s32.totalorder %s73, 0
      %s76 = sadd.s32 %s75, 1
      %s77 = scalar_select %p74, %s75, %s76
      %p80 = pneg %p74
      %p81 = scmp.eq.s32.totalorder %s16, 2
      %p82 = por %p80, %p81
      %p83 = scmp.ne.s32.totalorder %s75, %s78
      %p84 = scmp.eq.s32.totalorder %s16, 0
      %p85 = por %p83, %p84
      %p86 = scmp.ne.s32.totalorder %s75, %s78
      %p87 = scmp.eq.s32.totalorder %s21, 2
      %p88 = por %p86, %p87
      %p89 = scmp.ne.s32.totalorder %s78, %s79
      %p90 = scmp.eq.s32.totalorder %s21, 0
      %p91 = por %p89, %p90
      %p92 = scmp.ne.s32.totalorder %s78, %s79
      %p93 = scmp.eq.s32.totalorder %s22, 2
      %p94 = por %p92, %p93
      %p96 = scmp.ne.s32.totalorder %s79, %s95
      %p97 = scmp.eq.s32.totalorder %s22, 0
      %p98 = por %p96, %p97
      %s99 = ssub.s32 %s24, %s38
      %p100 = scmp.eq.s32.totalorder %s99, 0
      %s102 = sadd.s32 %s101, 1
      %s103 = scalar_select %p100, %s101, %s102
      %p106 = pneg %p100
      %p107 = scmp.eq.s32.totalorder %s16, 2
      %p108 = por %p106, %p107
      %p109 = scmp.ne.s32.totalorder %s101, %s104
      %p110 = scmp.eq.s32.totalorder %s16, 0
      %p111 = por %p109, %p110
      %p112 = scmp.ne.s32.totalorder %s101, %s104
      %p113 = scmp.eq.s32.totalorder %s21, 2
      %p114 = por %p112, %p113
      %p115 = scmp.ne.s32.totalorder %s104, %s105
      %p116 = scmp.eq.s32.totalorder %s21, 0
      %p117 = por %p115, %p116
      %p118 = scmp.ne.s32.totalorder %s104, %s105
      %p119 = scmp.eq.s32.totalorder %s22, 2
      %p120 = por %p118, %p119
      %p122 = scmp.ne.s32.totalorder %s105, %s121
      %p123 = scmp.eq.s32.totalorder %s22, 0
      %p124 = por %p122, %p123
      %s125 = ssub.s32 %s23, %s42
      %s126 = ssub.s32 %s24, %s38
      %s127 = sor.u32 %s125, %s126
      %p128 = scmp.eq.s32.totalorder %s127, 0
      %s130 = sadd.s32 %s129, 1
      %s131 = scalar_select %p128, %s129, %s130
      %p134 = pneg %p128
      %p135 = scmp.eq.s32.totalorder %s16, 2
      %p136 = por %p134, %p135
      %p137 = scmp.ne.s32.totalorder %s129, %s132
      %p138 = scmp.eq.s32.totalorder %s16, 0
      %p139 = por %p137, %p138
      %p140 = scmp.ne.s32.totalorder %s129, %s132
      %p141 = scmp.eq.s32.totalorder %s21, 2
      %p142 = por %p140, %p141
      %p143 = scmp.ne.s32.totalorder %s132, %s133
      %p144 = scmp.eq.s32.totalorder %s21, 0
      %p145 = por %p143, %p144
      %p146 = scmp.ne.s32.totalorder %s132, %s133
      %p147 = scmp.eq.s32.totalorder %s22, 2
      %p148 = por %p146, %p147
      %p150 = scmp.ne.s32.totalorder %s133, %s149
      %p151 = scmp.eq.s32.totalorder %s22, 0
      %p152 = por %p150, %p151
      %p153 = scmp.le.s32.totalorder 1, %s16
      %p154 = scmp.lt.s32.totalorder %s16, 4
      %p155 = pnand %p153, %p154
      %p156 = pneg %p155
      // Predicated region
      $region9: #{tpu_custom_call.1} parent=5 // pred_check
        _
      $region10: #{tpu_custom_call.1} parent=5 // pred_check_branch
        %158 = sbr.rel (%p155) target = $region12
      $region11: #{tpu_custom_call.1} parent=5 // pred_region
        %s159 = ssub.s32 %s16, 1
        // Predicated region
        $region13: #{tpu_custom_call.1} parent=11 // pred_check
          %p160 = pneg %p117
        $region14: #{tpu_custom_call.1} parent=11 // pred_check_branch
          %162 = sbr.rel (%p160) target = $region16
        $region15: #{tpu_custom_call.1} parent=11 // pred_region
          %p163 = scmp.lt.s32.totalorder %s27, 0
          %s164 = scalar_select %p163, %s27, 0
          %s165 = scalar_lea.vmem %s2, %s164
        $region16: #{tpu_custom_call.1} parent=11 // pred_fallthru
          _
      $region12: #{tpu_custom_call.1} parent=5 // pred_fallthru
        _
      %p166 = scmp.lt.s32.totalorder %s16, 3
      // Predicated region
      $region17: #{tpu_custom_call.1} parent=5 // pred_check
        %p167 = pneg %p166
      $region18: #{tpu_custom_call.1} parent=5 // pred_check_branch
        %169 = sbr.rel (%p167) target = $region20
      $region19: #{tpu_custom_call.1} parent=5 // pred_region
        // Predicated region
        $region21: #{tpu_custom_call.1} parent=19 // pred_check
          %p170 = pneg %p57
        $region22: #{tpu_custom_call.1} parent=19 // pred_check_branch
          %172 = sbr.rel (%p170) target = $region24
        $region23: #{tpu_custom_call.1} parent=19 // pred_region
          %s173 = sand.u32 %s47, 1
          %s174 = scalar_lea.sflag [#allocation4], %s173
          %s175 = sand.u32 %s47, 1
          %s176 = smul.addr %s175, 8
          %s177 = scalar_lea.vmem [#allocation3], %s176
          %s178 = smul.u32 2, %s23
          %s180 = ssub.s32 128, 128
          %181 = vsyncadd %s174, %s180
          %s182 = smul.addr %s178, 3
          %s183 = sadd.s32 %s25, %s182
          %s184 = smul.addr %s183, 64
          %s185 = scalar_lea.hbm %s0, %s184
          %s186 = sshll.u32 %s177, 4
          %s187 = int_to_ptr.vmem [resolvable:$true] %s186
          %192 = dma.hbm_to_vmem [thread:$0]  %s185, 128, %s187, %s174, 192, 64, 4
        $region24: #{tpu_custom_call.1} parent=19 // pred_fallthru
          _
        // Predicated region
        $region25: #{tpu_custom_call.1} parent=19 // pred_check
          %p193 = pneg %p85
        $region26: #{tpu_custom_call.1} parent=19 // pred_check_branch
          %195 = sbr.rel (%p193) target = $region28
        $region27: #{tpu_custom_call.1} parent=19 // pred_region
          %s196 = sand.u32 %s75, 1
          %s197 = scalar_lea.sflag [#allocation7], %s196
          %s198 = sand.u32 %s75, 1
          %s199 = smul.addr %s198, 64
          %s200 = scalar_lea.vmem [#allocation6], %s199
          %s201 = smul.u32 16, %s25
          %s203 = ssub.s32 1024, 1024
          %204 = vsyncadd %s197, %s203
          %s205 = sadd.s32 %s24, %s201
          %s206 = smul.addr %s205, 64
          %s207 = scalar_lea.hbm %s1, %s206
          %s208 = sshll.u32 %s200, 4
          %s209 = int_to_ptr.vmem [resolvable:$true] %s208
          %214 = dma.hbm_to_vmem [thread:$0]  %s207, 1024, %s209, %s197, 64, 64, 4
        $region28: #{tpu_custom_call.1} parent=19 // pred_fallthru
          _
      $region20: #{tpu_custom_call.1} parent=5 // pred_fallthru
        _
      %p215 = scmp.le.s32.totalorder 1, %s16
      %p216 = scmp.lt.s32.totalorder %s16, 4
      %p217 = pnand %p215, %p216
      %p218 = pneg %p217
      // Predicated region
      $region29: #{tpu_custom_call.1} parent=5 // pred_check
        _
      $region30: #{tpu_custom_call.1} parent=5 // pred_check_branch
        %220 = sbr.rel (%p217) target = $region32
      $region31: #{tpu_custom_call.1} parent=5 // pred_region
        %s221 = ssub.s32 %s16, 1
        %s222 = sand.u32 %s50, 1
        %s223 = scalar_lea.sflag [#allocation4], %s222
        %s224 = sand.u32 %s50, 1
        %s225 = smul.addr %s224, 8
        %s226 = scalar_lea.vmem [#allocation3], %s225
        // Predicated region
        $region33: #{tpu_custom_call.1} parent=31 // pred_check
          %p227 = pneg %p63
        $region34: #{tpu_custom_call.1} parent=31 // pred_check_branch
          %229 = sbr.rel (%p227) target = $region36
        $region35: #{tpu_custom_call.1} parent=31 // pred_region
          %230 = dma.done %s223, 128
        $region36: #{tpu_custom_call.1} parent=31 // pred_fallthru
          _
        %s231 = sand.u32 %s78, 1
        %s232 = scalar_lea.sflag [#allocation7], %s231
        %s233 = sand.u32 %s78, 1
        %s234 = smul.addr %s233, 64
        %s235 = scalar_lea.vmem [#allocation6], %s234
        // Predicated region
        $region37: #{tpu_custom_call.1} parent=31 // pred_check
          %p236 = pneg %p91
        $region38: #{tpu_custom_call.1} parent=31 // pred_check_branch
          %238 = sbr.rel (%p236) target = $region40
        $region39: #{tpu_custom_call.1} parent=31 // pred_region
          %239 = dma.done %s232, 1024
        $region40: #{tpu_custom_call.1} parent=31 // pred_fallthru
          _
        %s240 = sand.u32 %s50, 1
        %s241 = scalar_lea.sflag [#allocation4], %s240
        %s242 = sand.u32 %s50, 1
        %s243 = smul.addr %s242, 8
        %s244 = scalar_lea.vmem [#allocation3], %s243
        %p245 = pneg %p63
        %p246 = pneg %p60
        %s247 = sand.u32 %s78, 1
        %s248 = scalar_lea.sflag [#allocation7], %s247
        %s249 = sand.u32 %s78, 1
        %s250 = smul.addr %s249, 64
        %s251 = scalar_lea.vmem [#allocation6], %s250
        %p252 = pneg %p91
        %p253 = pneg %p88
        %p254 = scmp.lt.s32.totalorder %s27, 0
        %s255 = scalar_select %p254, %s27, 0
        %s256 = scalar_lea.vmem %s2, %s255
        %p257 = pneg %p117
        %p258 = pneg %p114
        %p259 = pneg %p145
        %p260 = pneg %p142
        %s261 = smul.u32 2, %s26
        %s262 = smul.u32 16, %s28
        %p263 = scmp.lt.s32.totalorder %s27, 0
        %s264 = scalar_select %p263, %s27, 0
        %s265 = scalar_lea.vmem %s2, %s264
        %s266 = smul.u32 2, %s26
        %p268 = scmp.eq.s32.totalorder %s28, 0
        // Predicated region
        $region41: #{tpu_custom_call.1} parent=31 // pred_check
          %p269 = pneg %p268
        $region42: #{tpu_custom_call.1} parent=31 // pred_check_branch
          %271 = sbr.rel (%p269) target = $region44
        $region43: #{tpu_custom_call.1} parent=31 // pred_region
          %272 = vst [vmem:[#allocation2] sm:$0xff] 0.0
          %273 = vst [vmem:[#allocation2 + $0x8] sm:$0xff] 0.0
        $region44: #{tpu_custom_call.1} parent=31 // pred_fallthru
          _
        %v274 = vld [vmem:[#allocation2] sm:$0xff]
        %v275 = vld [vmem:[#allocation2 + $0x8] sm:$0xff]
        %v276 = vld [vmem:[%s226] sm:$0xf]
        %v277 = vld [vmem:[%s226 + $0x4] sm:$0xf]
        %v278 = vld [vmem:[%s235] sm:$0xf]
        %v279 = vld [vmem:[%s235 + $0x4] sm:$0xf]
        %v280 = vld [vmem:[%s235 + $0x8] sm:$0xf]
        %v281 = vld [vmem:[%s235 + $0xc] sm:$0xf]
        %v282 = vld [vmem:[%s235 + $0x10] sm:$0xf]
        %v283 = vld [vmem:[%s235 + $0x14] sm:$0xf]
        %v284 = vld [vmem:[%s235 + $0x18] sm:$0xf]
        %v285 = vld [vmem:[%s235 + $0x1c] sm:$0xf]
        %v286 = vld [vmem:[%s235 + $0x20] sm:$0xf]
        %v287 = vld [vmem:[%s235 + $0x24] sm:$0xf]
        %v288 = vld [vmem:[%s235 + $0x28] sm:$0xf]
        %v289 = vld [vmem:[%s235 + $0x2c] sm:$0xf]
        %v290 = vld [vmem:[%s235 + $0x30] sm:$0xf]
        %v291 = vld [vmem:[%s235 + $0x34] sm:$0xf]
        %v292 = vld [vmem:[%s235 + $0x38] sm:$0xf]
        %v293 = vld [vmem:[%s235 + $0x3c] sm:$0xf]
        %v296 = vunpack.c.l.b16 %v276
        %v297 = vunpack.c.l.b16 %v277
        %v298 = vpack.c.b16 %v297, %v296
        %v316 = vunpack.c.l.b16 %v278
        %v317 = vunpack.c.l.b16 %v279
        %v318 = vunpack.c.l.b16 %v280
        %v319 = vunpack.c.l.b16 %v281
        %v320 = vunpack.c.l.b16 %v282
        %v321 = vunpack.c.l.b16 %v283
        %v322 = vunpack.c.l.b16 %v284
        %v323 = vunpack.c.l.b16 %v285
        %v324 = vunpack.c.l.b16 %v286
        %v325 = vunpack.c.l.b16 %v287
        %v326 = vunpack.c.l.b16 %v288
        %v327 = vunpack.c.l.b16 %v289
        %v328 = vunpack.c.l.b16 %v290
        %v329 = vunpack.c.l.b16 %v291
        %v330 = vunpack.c.l.b16 %v292
        %v331 = vunpack.c.l.b16 %v293
        %v332 = vpack.c.b16 %v317, %v316
        %v333 = vpack.c.b16 %v319, %v318
        %v334 = vpack.c.b16 %v321, %v320
        %v335 = vpack.c.b16 %v323, %v322
        %v336 = vpack.c.b16 %v325, %v324
        %v337 = vpack.c.b16 %v327, %v326
        %v338 = vpack.c.b16 %v329, %v328
        %v339 = vpack.c.b16 %v331, %v330
        %348 = vmatprep.subr.bf16.mxu0 0
        %349 = vmatpush1.bf16.msra.mxu0 %v332
        %350 = vmatprep.subr.bf16.mxu0 0
        %351 = vmatpush1.bf16.msra.mxu0 %v333
        %352 = vmatprep.subr.bf16.mxu0 0
        %353 = vmatpush1.bf16.msra.mxu0 %v334
        %354 = vmatprep.subr.bf16.mxu0 0
        %355 = vmatpush1.bf16.msra.mxu0 %v335
        %356 = vmatprep.subr.bf16.mxu0 0
        %357 = vmatpush1.bf16.msra.mxu0 %v336
        %358 = vmatprep.subr.bf16.mxu0 0
        %359 = vmatpush1.bf16.msra.mxu0 %v337
        %360 = vmatprep.subr.bf16.mxu0 0
        %361 = vmatpush1.bf16.msra.mxu0 %v338
        %362 = vmatprep.subr.bf16.mxu0 0
        %363 = vmatpush1.bf16.msra.mxu0 %v339
        %364 = vmatprep.subr.bf16.mxu0 0
        %365 = vmatpush1.bf16.msra.mxu0 0
        %366 = vmatprep.subr.bf16.mxu0 0
        %367 = vmatpush1.bf16.msra.mxu0 0
        %368 = vmatprep.subr.bf16.mxu0 0
        %369 = vmatpush1.bf16.msra.mxu0 0
        %370 = vmatprep.subr.bf16.mxu0 0
        %371 = vmatpush1.bf16.msra.mxu0 0
        %372 = vmatprep.subr.bf16.mxu0 0
        %373 = vmatpush1.bf16.msra.mxu0 0
        %374 = vmatprep.subr.bf16.mxu0 0
        %375 = vmatpush1.bf16.msra.mxu0 0
        %376 = vmatprep.subr.bf16.mxu0 0
        %377 = vmatpush1.bf16.msra.mxu0 0
        %378 = vmatprep.subr.bf16.mxu0 0
        %379 = vmatpush1.bf16.msra.mxu0 0
        %380 = vmatprep.mubr.bf16.mxu0 0
        %381 = vmatmul.mubr.bf16.gmra.mrb[0].mxu0 %v298
        %v382 = vpop.f32.mrb[0].mxu0
        %v383 = vadd.f32 0.0, %v382
        %v384 = vpop.f32.mrb[0].mxu0
        %v385 = vpop.f32.mrb[0].mxu0
        %v386 = vadd.f32 0.0, %v385
        %v387 = vpop.f32.mrb[0].mxu0
        %388 = vdwg.mxu0
        %v389 = vadd.f32 %v274, %v383
        %v390 = vadd.f32 %v275, %v386
        %391 = vst [vmem:[#allocation2] sm:$0xff] %v389
        %392 = vst [vmem:[#allocation2 + $0x8] sm:$0xff] %v390
        %p393 = scmp.eq.s32.totalorder %s28, 2
        // Predicated region
        $region45: #{tpu_custom_call.1} parent=31 // pred_check
          %p394 = pneg %p393
        $region46: #{tpu_custom_call.1} parent=31 // pred_check_branch
          %396 = sbr.rel (%p394) target = $region48
        $region47: #{tpu_custom_call.1} parent=31 // pred_region
          %v397 = vld [vmem:[#allocation2] sm:$0xff]
          %v398 = vld [vmem:[#allocation2 + $0x8] sm:$0xff]
          %v399 = vld [vmem:[%s265] sm:$0x1]
          %v401 = vlaneseq
          %v402 = vshrl.u32 %v401, 7
          %v403 = vsub.s32 0, %v402
          %v404 = vrot.slane %v399, %v403
          %v406 = vadd.f32 %v397, %v404
          %v407 = vadd.f32 %v398, %v404
          %v408 = vmax.f32 %v406, 0.0
          %v409 = vmax.f32 %v407, 0.0
          %410 = vst [vmem:[#allocation8] sm:$0xff] %v408
          %411 = vst [vmem:[#allocation8 + $0x8] sm:$0xff] %v409
        $region48: #{tpu_custom_call.1} parent=31 // pred_fallthru
          _
        // Predicated region
        $region49: #{tpu_custom_call.1} parent=31 // pred_check
          %p412 = pneg %p142
        $region50: #{tpu_custom_call.1} parent=31 // pred_check_branch
          %414 = sbr.rel (%p412) target = $region52
        $region51: #{tpu_custom_call.1} parent=31 // pred_region
          %s415 = smul.u32 2, %s26
          %s417 = ssub.s32 256, 256
          %418 = vsyncadd [#allocation5], %s417
          %s419 = sadd.s32 %s27, %s415
          %s420 = smul.addr %s419, 128
          %s421 = scalar_lea.hbm %s3, %s420
          %s422 = sshll.u32 [#allocation8], 4
          %s423 = int_to_ptr.vmem [resolvable:$true] %s422
          %428 = dma.vmem_to_hbm [thread:$0]  %s423, 256, %s421, [#allocation5], 128, 128, 8
        $region52: #{tpu_custom_call.1} parent=31 // pred_fallthru
          _
        // Predicated region
        $region53: #{tpu_custom_call.1} parent=31 // pred_check
          %p429 = pneg %p142
        $region54: #{tpu_custom_call.1} parent=31 // pred_check_branch
          %431 = sbr.rel (%p429) target = $region56
        $region55: #{tpu_custom_call.1} parent=31 // pred_region
          %432 = dma.done [#allocation5], 256
        $region56: #{tpu_custom_call.1} parent=31 // pred_fallthru
          _
      $region32: #{tpu_custom_call.1} parent=5 // pred_fallthru
        _
      %p433 = scmp.le.s32.totalorder 2, %s16
      // Predicated region
      $region57: #{tpu_custom_call.1} parent=5 // pred_check
        %p434 = pneg %p433
      $region58: #{tpu_custom_call.1} parent=5 // pred_check_branch
        %436 = sbr.rel (%p434) target = $region60
      $region59: #{tpu_custom_call.1} parent=5 // pred_region
        %s437 = ssub.s32 %s16, 2
      $region60: #{tpu_custom_call.1} parent=5 // pred_fallthru
        _
    $region6: #{tpu_custom_call.1} parent=1 // loop_footer
      %s20 = sadd.s32 1, %s16
    $region7: #{tpu_custom_call.1} parent=1 // loop_footer_branch
      %15 = sbr.rel target = $region3
    $region8: #{tpu_custom_call.1} parent=1 // loop_exit
      _
    %438 = vsyncpa [#allocation4], 1
    %s439 = scalar_lea.sflag [#allocation4], 1
    %440 = vsyncpa %s439, 1
    %441 = vsyncpa [#allocation7], 1
    %s442 = scalar_lea.sflag [#allocation7], 1
    %443 = vsyncpa %s442, 1
    %444 = vsyncpa [#allocation5], 1
    %s445 = scalar_lea.sflag [#allocation5], 1
    %446 = vsyncpa %s445, 1

</llo_original>
